<compile_context>
chip_gen: v7x
topology: tpu7x:2x2x1
jax: 0.10.0
libtpu: 0.0.40
codegen_flags: <defaults>
</compile_context>

<pallas_src>
import jax
import jax.numpy as jnp
from jax.experimental import pallas as pl
from jax.experimental.pallas import tpu as pltpu


def _argument_attention_kernel(x_ref, lab_ref, w_ref, b_ref, v_ref, o_ref):
    # x_ref:   (TR, H)      encoder-output rows, native dtype
    # lab_ref: (TR, 1)      entity labels, raw dtype
    # w_ref:   (H, A_pad)   attn weight (input dtype, right-multiply form)
    # b_ref:   (1, A_pad)   attn bias with the 1e-9 epsilon folded in (f32)
    # v_ref:   (1, A_pad)   v weight as a lane-dense row (f32)
    # o_ref:   (TR, H)      weighted feature rows
    x = x_ref[...]
    lab = lab_ref[...].astype(x.dtype)                       # (TR, 1)
    masked = x * lab                                         # (TR, H), native dtype

    # attn linear (MXU, f32 accumulate) + tanh (EUP).  The reference's
    # "(x*lab + 1e-9) @ W + b" epsilon lives in b_ref (= b + 1e-9*colsum(W)).
    h = jnp.tanh(jnp.dot(masked, w_ref[...],
                         preferred_element_type=jnp.float32) + b_ref[...])

    # v linear (N=1): VPU multiply + XLU lane reduction instead of a 1-column
    # MXU matmul.
    e = jnp.sum(h * v_ref[...], axis=-1, keepdims=True)      # (TR, 1) f32
    attn_weights = jax.nn.sigmoid(e)                         # (TR, 1) f32

    o_ref[...] = (x * attn_weights.astype(x.dtype)).astype(o_ref.dtype)


def _vmem_budget_bytes():
    # Generation-aware VMEM budget: 128 MiB on v5e/v6e, 64 MiB on v7x.
    cap = 64 * 1024 * 1024  # conservative fallback (v7x per-TensorCore VMEM)
    try:
        info = pltpu.get_tpu_info()
        cap = int(getattr(info, "vmem_capacity_bytes", cap))
    except Exception:
        pass
    return int(cap * 0.70)  # headroom for Mosaic-internal scratch


def _row_tile_bytes(h, x_itemsize, a_pad):
    # Per-row VMEM bytes: double-buffered in+out x blocks, lane-padded label
    # blocks, in-kernel (row, H) temporaries, and (row, A_pad) intermediates.
    return (4 * h * x_itemsize
            + 2 * 128 * 4
            + 2 * h * 4
            + 4 * a_pad * 4)


def _fixed_bytes(h, a_pad, x_itemsize):
    # Weights (double-buffered) + bias + v rows.
    return 2 * h * a_pad * x_itemsize + 4 * 2 * a_pad * 4


def _pick_row_tile(n_rows, h, x_itemsize, a_pad, vmem_budget):
    per_row = _row_tile_bytes(h, x_itemsize, a_pad)
    fixed = _fixed_bytes(h, a_pad, x_itemsize)
    target_rows = (4 * 1024 * 1024) // max(1, h * x_itemsize)   # ~4 MiB x tile
    budget_rows = max(8, (vmem_budget - fixed) // per_row)
    tr = max(8, min(int(target_rows), int(budget_rows), 4096)) // 8 * 8
    tr = max(tr, 8)
    if tr >= n_rows:
        # Whole problem fits in one tile: split in two (when cleanly possible)
        # so both v7x TensorCores get a grid step.
        if n_rows >= 16 and n_rows % 16 == 0:
            return n_rows // 2
        return n_rows
    # Prefer a tile that divides n_rows (no masked edge block), but don't
    # shrink below half the byte target just for divisibility.
    cand = tr
    while cand >= 8 and cand * 2 >= tr:
        if n_rows % cand == 0:
            return cand
        cand -= 8
    return tr  # non-divisible: Pallas masks the trailing partial block


def argument_attention(encoder_outputs, entity_labels, attn_w, attn_b, v_w):
    """encoder_outputs: [B, S, H]; entity_labels: [B, S] (any numeric dtype)."""
    B, S, H = encoder_outputs.shape
    Hw, A = attn_w.shape
    assert Hw == H, "attn_w must be [hidden_size, attn_hidden_size]"

    x_dtype = encoder_outputs.dtype
    x_itemsize = jnp.dtype(x_dtype).itemsize

    # Pad the attention hidden dim to a lane multiple of 128.  Zero padding is
    # exact: tanh(0 + 0) * 0 contributes nothing to the reduction.
    A_pad = max(128, ((A + 127) // 128) * 128)

    # Fold the reference's +1e-9 epsilon into the bias:
    #   (x*lab + eps) @ W + b == (x*lab) @ W + (b + eps * colsum(W)).
    attn_b_eff = attn_b.astype(jnp.float32) + 1e-9 * jnp.sum(
        attn_w.astype(jnp.float32), axis=0)

    w = jnp.zeros((H, A_pad), x_dtype).at[:, :A].set(attn_w.astype(x_dtype))
    b = jnp.zeros((1, A_pad), jnp.float32).at[:, :A].set(attn_b_eff.reshape(1, A))
    v = jnp.zeros((1, A_pad), jnp.float32).at[:, :A].set(
        v_w.reshape(1, A).astype(jnp.float32))

    # Flatten batch x sequence (metadata-only): the op is fully row-independent.
    N = B * S
    x2 = encoder_outputs.reshape(N, H)
    labels = entity_labels.reshape(N, 1)
    lab_itemsize = jnp.dtype(labels.dtype).itemsize

    vmem_budget = _vmem_budget_bytes()
    TR = _pick_row_tile(N, H, x_itemsize, A_pad, vmem_budget)
    grid = (pl.cdiv(N, TR),)

    needed = TR * _row_tile_bytes(H, x_itemsize, A_pad) + _fixed_bytes(H, A_pad, x_itemsize)
    vmem_limit = int(min(max(needed + (4 << 20), 32 << 20), vmem_budget))

    cost = pl.CostEstimate(
        flops=int(2 * N * H * A_pad          # attn matmul
                  + 3 * N * A_pad            # bias add, v multiply, lane reduce
                  + 3 * N * H),              # mask multiply + output scale
        transcendentals=int(N * (A_pad + 1)),
        bytes_accessed=int(2 * N * H * x_itemsize
                           + N * lab_itemsize
                           + H * A_pad * x_itemsize + 2 * A_pad * 4),
    )

    out = pl.pallas_call(
        _argument_attention_kernel,
        out_shape=jax.ShapeDtypeStruct((N, H), x_dtype),
        grid_spec=pltpu.PrefetchScalarGridSpec(
            num_scalar_prefetch=0,
            grid=grid,
            in_specs=[
                pl.BlockSpec((TR, H), lambda i: (i, 0)),
                pl.BlockSpec((TR, 1), lambda i: (i, 0)),
                pl.BlockSpec((H, A_pad), lambda i: (0, 0)),
                pl.BlockSpec((1, A_pad), lambda i: (0, 0)),
                pl.BlockSpec((1, A_pad), lambda i: (0, 0)),
            ],
            out_specs=pl.BlockSpec((TR, H), lambda i: (i, 0)),
        ),
        compiler_params=pltpu.CompilerParams(
            dimension_semantics=("parallel",),
            vmem_limit_bytes=vmem_limit),
        cost_estimate=cost,
    )(x2, labels, w, b, v)

    return out.reshape(B, S, H)


def _reference(encoder_outputs, entity_labels, attn_w, attn_b, v_w):
    masked = encoder_outputs * entity_labels.astype(jnp.float32)[..., None] + 1e-9
    e = jnp.squeeze(jnp.tanh(masked @ attn_w + attn_b) @ v_w, axis=-1)
    w = jax.nn.sigmoid(e)
    return encoder_outputs * w[..., None]


if __name__ == "__main__":
    B, S, H, A = 2, 8, 32, 16

    key = jax.random.PRNGKey(0)
    k1, k2, k3, k4, k5 = jax.random.split(key, 5)

    encoder_outputs = jax.random.normal(k1, (B, S, H), dtype=jnp.float32)
    entity_labels = (jax.random.uniform(k2, (B, S)) > 0.5).astype(jnp.int32)

    # Deterministic params (shapes per nn.Linear(H, A) and nn.Linear(A, 1)).
    attn_w = jax.random.normal(k3, (H, A), dtype=jnp.float32) * 0.1   # [H, A]
    attn_b = jax.random.normal(k4, (A,), dtype=jnp.float32) * 0.1     # [A]
    v_w = jax.random.normal(k5, (A, 1), dtype=jnp.float32) * 0.1      # [A, 1]

    out = argument_attention(encoder_outputs, entity_labels, attn_w, attn_b, v_w)
    out = jax.block_until_ready(out)

    ref = _reference(encoder_outputs, entity_labels, attn_w, attn_b, v_w)
    assert out.shape == (B, S, H)
    assert jnp.allclose(out, ref, atol=5e-3, rtol=5e-3), "mismatch vs reference"

    print("KERNEL_OK")
</pallas_src>

<mosaic_0001>
module attributes {stable_mosaic.version = 11 : i64} {
  func.func @_argument_attention_kernel(%arg0: i32, %arg1: memref<8x32xf32, #tpu.memory_space<vmem>>, %arg2: memref<8x1xi32, #tpu.memory_space<vmem>>, %arg3: memref<32x128xf32, #tpu.memory_space<vmem>>, %arg4: memref<1x128xf32, #tpu.memory_space<vmem>>, %arg5: memref<1x128xf32, #tpu.memory_space<vmem>>, %arg6: memref<8x32xf32, #tpu.memory_space<vmem>>) attributes {dimension_semantics = [#tpu.dimension_semantics<parallel>], iteration_bounds = array<i64: 2>, scalar_prefetch = 0 : i64, scratch_operands = 0 : i64, tpu.core_type = #tpu.core_type<tc>, window_params = [{transform_indices = @transform_0, window_bounds = array<i64: 8, 32>}, {transform_indices = @transform_1, window_bounds = array<i64: 8, 1>}, {pipeline_mode = #tpu.pipeline_mode<synchronous>, transform_indices = @transform_2, window_bounds = array<i64: 32, 128>}, {pipeline_mode = #tpu.pipeline_mode<synchronous>, transform_indices = @transform_3, window_bounds = array<i64: 1, 128>}, {pipeline_mode = #tpu.pipeline_mode<synchronous>, transform_indices = @transform_4, window_bounds = array<i64: 1, 128>}, {transform_indices = @transform_5, window_bounds = array<i64: 8, 32>}]} {
    %c0 = arith.constant 0 : index
    %c0_0 = arith.constant 0 : index
    %0 = vector.load %arg1[%c0, %c0_0] : memref<8x32xf32, #tpu.memory_space<vmem>>, vector<8x32xf32>
    %c0_1 = arith.constant 0 : index
    %c0_2 = arith.constant 0 : index
    %1 = vector.load %arg2[%c0_1, %c0_2] : memref<8x1xi32, #tpu.memory_space<vmem>>, vector<8x1xi32>
    %2 = arith.sitofp %1 : vector<8x1xi32> to vector<8x1xf32>
    %3 = vector.broadcast %2 : vector<8x1xf32> to vector<8x32xf32>
    %4 = arith.mulf %0, %3 : vector<8x32xf32>
    %c0_3 = arith.constant 0 : index
    %c0_4 = arith.constant 0 : index
    %5 = vector.load %arg3[%c0_3, %c0_4] : memref<32x128xf32, #tpu.memory_space<vmem>>, vector<32x128xf32>
    %cst = arith.constant dense<0.000000e+00> : vector<8x128xf32>
    %6 = tpu.matmul %4, %5, %cst {dimension_numbers = #tpu.dot_dimension_numbers<[1], [0], [0], [1], [0, 0, 1, 1], [], []>} : vector<8x32xf32>, vector<32x128xf32>, vector<8x128xf32> -> vector<8x128xf32>
    %c0_5 = arith.constant 0 : index
    %c0_6 = arith.constant 0 : index
    %7 = vector.load %arg4[%c0_5, %c0_6] : memref<1x128xf32, #tpu.memory_space<vmem>>, vector<1x128xf32>
    %8 = vector.broadcast %7 : vector<1x128xf32> to vector<8x128xf32>
    %9 = arith.addf %6, %8 : vector<8x128xf32>
    %10 = math.tanh %9 : vector<8x128xf32>
    %c0_7 = arith.constant 0 : index
    %c0_8 = arith.constant 0 : index
    %11 = vector.load %arg5[%c0_7, %c0_8] : memref<1x128xf32, #tpu.memory_space<vmem>>, vector<1x128xf32>
    %12 = vector.broadcast %11 : vector<1x128xf32> to vector<8x128xf32>
    %13 = arith.mulf %10, %12 : vector<8x128xf32>
    %cst_9 = arith.constant dense<0.000000e+00> : vector<8xf32>
    %14 = vector.multi_reduction <add>, %13, %cst_9 [1] : vector<8x128xf32> to vector<8xf32>
    %15 = vector.shape_cast %14 : vector<8xf32> to vector<8x1xf32>
    %16 = arith.negf %15 : vector<8x1xf32>
    %17 = math.exp %16 : vector<8x1xf32>
    %cst_10 = arith.constant 1.000000e+00 : f32
    %18 = vector.broadcast %cst_10 : f32 to vector<8x1xf32>
    %19 = arith.addf %18, %17 : vector<8x1xf32>
    %20 = arith.divf %18, %19 : vector<8x1xf32>
    %21 = vector.broadcast %20 : vector<8x1xf32> to vector<8x32xf32>
    %22 = arith.mulf %0, %21 : vector<8x32xf32>
    %c0_11 = arith.constant 0 : index
    %c0_12 = arith.constant 0 : index
    %23 = vector.load %arg6[%c0_11, %c0_12] : memref<8x32xf32, #tpu.memory_space<vmem>>, vector<8x32xf32>
    tpu.vector_store %arg6[%c0_11, %c0_12], %22 {strides = array<i32>} : memref<8x32xf32, #tpu.memory_space<vmem>>, vector<8x32xf32>,
    return
  }
  func.func @transform_0(%arg0: i32) -> (i32, i32) {
    %c0_i32 = arith.constant 0 : i32
    %c0_i32_0 = arith.constant 0 : i32
    return %arg0, %c0_i32 : i32, i32
  }
  func.func @transform_1(%arg0: i32) -> (i32, i32) {
    %c0_i32 = arith.constant 0 : i32
    %c0_i32_0 = arith.constant 0 : i32
    return %arg0, %c0_i32 : i32, i32
  }
  func.func @transform_2(%arg0: i32) -> (i32, i32) {
    %c0_i32 = arith.constant 0 : i32
    %c0_i32_0 = arith.constant 0 : i32
    %c0_i32_1 = arith.constant 0 : i32
    return %c0_i32, %c0_i32_0 : i32, i32
  }
  func.func @transform_3(%arg0: i32) -> (i32, i32) {
    %c0_i32 = arith.constant 0 : i32
    %c0_i32_0 = arith.constant 0 : i32
    %c0_i32_1 = arith.constant 0 : i32
    return %c0_i32, %c0_i32_0 : i32, i32
  }
  func.func @transform_4(%arg0: i32) -> (i32, i32) {
    %c0_i32 = arith.constant 0 : i32
    %c0_i32_0 = arith.constant 0 : i32
    %c0_i32_1 = arith.constant 0 : i32
    return %c0_i32, %c0_i32_0 : i32, i32
  }
  func.func @transform_5(%arg0: i32) -> (i32, i32) {
    %c0_i32 = arith.constant 0 : i32
    %c0_i32_0 = arith.constant 0 : i32
    return %arg0, %c0_i32 : i32, i32
  }
}

</mosaic_0001>

<llo_original>
// kernel: tpu_custom_call.1
$region0: #{tpu_custom_call.1}
  #allocation0 [shape = 'u32[]', space=smem, size = 0x4, offset = 0x4, fixed_abs, tag = 'smem constant byte address 0x4 - core index']
  #allocation1 [shape = 'u32[144,128]{1,0:T(1,128)}', space=vmem, size = 0x12000, scoped, tag = 'internal scratch']
  %s0 = inlined_call_operand.vmem [shape: f32[16,32], index: 0, kind: input, shape index: {}]
  %s1 = inlined_call_operand.vmem [shape: s32[16,1], index: 1, kind: input, shape index: {}]
  %s2 = inlined_call_operand.hbm [shape: f32[32,128], index: 2, kind: input, shape index: {}]
  %s3 = inlined_call_operand.vmem [shape: f32[1,128], index: 3, kind: input, shape index: {}]
  %s4 = inlined_call_operand.vmem [shape: f32[1,128], index: 4, kind: input, shape index: {}]
  %s5 = inlined_call_operand.hbm [shape: f32[16,32], index: 5, kind: output, shape index: {}]
  %s6 = sld [smem:[#allocation0]]
  $region57: #{tpu_custom_call.1} parent=0
    _
  %s8 = ssub.s32 1, %s6
  %s9 = scalar_select 0, %s8, %s6
  $region1: #{tpu_custom_call.1} parent=0
    #allocation2 [shape = 'u8[16384]{0}', space=vmem, size = 0x4000, scoped, tag = 'input window, operand 2, single buffered']
    #allocation3 [shape = 's32[2]{0}', space=sflag, size = 0x8, scoped, tag = 'scoped memory for tpu_custom_call.1']
    #allocation4 [shape = 's32[2]{0}', space=sflag, size = 0x8, scoped, tag = 'scoped memory for tpu_custom_call.1']
    #allocation5 [shape = 'u8[8192]{0}', space=vmem, size = 0x2000, scoped, tag = 'output window, operand 0']
    %10 = vsyncpa [#allocation3], 0
    %11 = vsyncpa [#allocation4], 0
    %s12 = scalar_lea.sflag [#allocation4], 1
    %13 = vsyncpa %s12, 0
    loop: start=0, step=1, limit=4
    $region2: #{tpu_custom_call.1} parent=1 // loop_pre_header
      _
    $region3: #{tpu_custom_call.1} parent=1 // loop_header
      %s15 = sphi 0, %s19
      %p16 = scmp.ge.s32.totalorder %s15, 4
      %s25 = sphi 0, %s27
      %s28 = sphi 0, %s25
      %s29 = sphi 0, %s28
      %s45 = sphi 0, %s29
      %s51 = sphi 0, %s53
      %s54 = sphi 0, %s51
      %s55 = sphi 0, %s54
      %s71 = sphi 0, %s55
      %s75 = sphi 0, %s75
      %s77 = sphi 0, %s75
      %s78 = sphi 0, %s77
      %s92 = sphi 0, %s78
      %s96 = sphi 0, %s96
      %s98 = sphi 0, %s96
      %s99 = sphi 0, %s98
      %s113 = sphi 0, %s99
      %s117 = sphi 0, %s117
      %s119 = sphi 0, %s117
      %s120 = sphi 0, %s119
      %s134 = sphi 0, %s120
      %s140 = sphi 0, %s142
      %s143 = sphi 0, %s140
      %s144 = sphi 0, %s143
      %s160 = sphi 0, %s144
    $region4: #{tpu_custom_call.1} parent=1 // loop_header_branch
      %18 = sbr.rel (%p16) target = $region8
    $region5: #{tpu_custom_call.1} parent=1 // loop_body
      %s20 = ssub.s32 %s15, 1
      %s21 = ssub.s32 %s15, 2
      %s22 = sadd.s32 %s15, 1
      %s23 = ssub.s32 %s15, %s22
      %p24 = scmp.eq.s32.totalorder %s23, 0
      %s26 = sadd.s32 %s25, 1
      %s27 = scalar_select %p24, %s25, %s26
      %p30 = pneg %p24
      %p31 = scmp.eq.s32.totalorder %s15, 1
      %p32 = por %p30, %p31
      %p33 = scmp.ne.s32.totalorder %s25, %s28
      %p34 = scmp.eq.s32.totalorder %s15, 0
      %p35 = por %p33, %p34
      %p36 = scmp.ne.s32.totalorder %s25, %s28
      %p37 = scmp.eq.s32.totalorder %s20, 1
      %p38 = por %p36, %p37
      %p39 = scmp.ne.s32.totalorder %s28, %s29
      %p40 = scmp.eq.s32.totalorder %s20, 0
      %p41 = por %p39, %p40
      %p42 = scmp.ne.s32.totalorder %s28, %s29
      %p43 = scmp.eq.s32.totalorder %s21, 1
      %p44 = por %p42, %p43
      %p46 = scmp.ne.s32.totalorder %s29, %s45
      %p47 = scmp.eq.s32.totalorder %s21, 0
      %p48 = por %p46, %p47
      %s49 = ssub.s32 %s15, %s22
      %p50 = scmp.eq.s32.totalorder %s49, 0
      %s52 = sadd.s32 %s51, 1
      %s53 = scalar_select %p50, %s51, %s52
      %p56 = pneg %p50
      %p57 = scmp.eq.s32.totalorder %s15, 1
      %p58 = por %p56, %p57
      %p59 = scmp.ne.s32.totalorder %s51, %s54
      %p60 = scmp.eq.s32.totalorder %s15, 0
      %p61 = por %p59, %p60
      %p62 = scmp.ne.s32.totalorder %s51, %s54
      %p63 = scmp.eq.s32.totalorder %s20, 1
      %p64 = por %p62, %p63
      %p65 = scmp.ne.s32.totalorder %s54, %s55
      %p66 = scmp.eq.s32.totalorder %s20, 0
      %p67 = por %p65, %p66
      %p68 = scmp.ne.s32.totalorder %s54, %s55
      %p69 = scmp.eq.s32.totalorder %s21, 1
      %p70 = por %p68, %p69
      %p72 = scmp.ne.s32.totalorder %s55, %s71
      %p73 = scmp.eq.s32.totalorder %s21, 0
      %p74 = por %p72, %p73
      %s76 = sadd.s32 %s75, 1
      %p79 = scmp.eq.s32.totalorder %s15, 1
      %p80 = scmp.ne.s32.totalorder %s75, %s77
      %p81 = scmp.eq.s32.totalorder %s15, 0
      %p82 = por %p80, %p81
      %p83 = scmp.ne.s32.totalorder %s75, %s77
      %p84 = scmp.eq.s32.totalorder %s20, 1
      %p85 = por %p83, %p84
      %p86 = scmp.ne.s32.totalorder %s77, %s78
      %p87 = scmp.eq.s32.totalorder %s20, 0
      %p88 = por %p86, %p87
      %p89 = scmp.ne.s32.totalorder %s77, %s78
      %p90 = scmp.eq.s32.totalorder %s21, 1
      %p91 = por %p89, %p90
      %p93 = scmp.ne.s32.totalorder %s78, %s92
      %p94 = scmp.eq.s32.totalorder %s21, 0
      %p95 = por %p93, %p94
      %s97 = sadd.s32 %s96, 1
      %p100 = scmp.eq.s32.totalorder %s15, 1
      %p101 = scmp.ne.s32.totalorder %s96, %s98
      %p102 = scmp.eq.s32.totalorder %s15, 0
      %p103 = por %p101, %p102
      %p104 = scmp.ne.s32.totalorder %s96, %s98
      %p105 = scmp.eq.s32.totalorder %s20, 1
      %p106 = por %p104, %p105
      %p107 = scmp.ne.s32.totalorder %s98, %s99
      %p108 = scmp.eq.s32.totalorder %s20, 0
      %p109 = por %p107, %p108
      %p110 = scmp.ne.s32.totalorder %s98, %s99
      %p111 = scmp.eq.s32.totalorder %s21, 1
      %p112 = por %p110, %p111
      %p114 = scmp.ne.s32.totalorder %s99, %s113
      %p115 = scmp.eq.s32.totalorder %s21, 0
      %p116 = por %p114, %p115
      %s118 = sadd.s32 %s117, 1
      %p121 = scmp.eq.s32.totalorder %s15, 1
      %p122 = scmp.ne.s32.totalorder %s117, %s119
      %p123 = scmp.eq.s32.totalorder %s15, 0
      %p124 = por %p122, %p123
      %p125 = scmp.ne.s32.totalorder %s117, %s119
      %p126 = scmp.eq.s32.totalorder %s20, 1
      %p127 = por %p125, %p126
      %p128 = scmp.ne.s32.totalorder %s119, %s120
      %p129 = scmp.eq.s32.totalorder %s20, 0
      %p130 = por %p128, %p129
      %p131 = scmp.ne.s32.totalorder %s119, %s120
      %p132 = scmp.eq.s32.totalorder %s21, 1
      %p133 = por %p131, %p132
      %p135 = scmp.ne.s32.totalorder %s120, %s134
      %p136 = scmp.eq.s32.totalorder %s21, 0
      %p137 = por %p135, %p136
      %s138 = ssub.s32 %s15, %s22
      %p139 = scmp.eq.s32.totalorder %s138, 0
      %s141 = sadd.s32 %s140, 1
      %s142 = scalar_select %p139, %s140, %s141
      %p145 = pneg %p139
      %p146 = scmp.eq.s32.totalorder %s15, 1
      %p147 = por %p145, %p146
      %p148 = scmp.ne.s32.totalorder %s140, %s143
      %p149 = scmp.eq.s32.totalorder %s15, 0
      %p150 = por %p148, %p149
      %p151 = scmp.ne.s32.totalorder %s140, %s143
      %p152 = scmp.eq.s32.totalorder %s20, 1
      %p153 = por %p151, %p152
      %p154 = scmp.ne.s32.totalorder %s143, %s144
      %p155 = scmp.eq.s32.totalorder %s20, 0
      %p156 = por %p154, %p155
      %p157 = scmp.ne.s32.totalorder %s143, %s144
      %p158 = scmp.eq.s32.totalorder %s21, 1
      %p159 = por %p157, %p158
      %p161 = scmp.ne.s32.totalorder %s144, %s160
      %p162 = scmp.eq.s32.totalorder %s21, 0
      %p163 = por %p161, %p162
      %p164 = scmp.le.s32.totalorder 1, %s15
      %p165 = scmp.lt.s32.totalorder %s15, 3
      %p166 = pnand %p164, %p165
      %p167 = pneg %p166
      // Predicated region
      $region9: #{tpu_custom_call.1} parent=5 // pred_check
        _
      $region10: #{tpu_custom_call.1} parent=5 // pred_check_branch
        %169 = sbr.rel (%p166) target = $region12
      $region11: #{tpu_custom_call.1} parent=5 // pred_region
        %s170 = ssub.s32 %s15, 1
        // Predicated region
        $region13: #{tpu_custom_call.1} parent=11 // pred_check
          %p171 = pneg %p88
        $region14: #{tpu_custom_call.1} parent=11 // pred_check_branch
          %173 = sbr.rel (%p171) target = $region16
        $region15: #{tpu_custom_call.1} parent=11 // pred_region
          %s175 = ssub.s32 512, 512
          %176 = vsyncadd [#allocation3], %s175
          %s177 = sshll.u32 [#allocation2], 4
          %s178 = int_to_ptr.vmem [resolvable:$true] %s177
          %183 = dma.hbm_to_vmem [thread:$0]  %s2, 512, %s178, [#allocation3], 128, 128, 8
        $region16: #{tpu_custom_call.1} parent=11 // pred_fallthru
          _
        // Predicated region
        $region17: #{tpu_custom_call.1} parent=11 // pred_check
          %p184 = pneg %p109
        $region18: #{tpu_custom_call.1} parent=11 // pred_check_branch
          %186 = sbr.rel (%p184) target = $region20
        $region19: #{tpu_custom_call.1} parent=11 // pred_region
          _
        $region20: #{tpu_custom_call.1} parent=11 // pred_fallthru
          _
        // Predicated region
        $region21: #{tpu_custom_call.1} parent=11 // pred_check
          %p187 = pneg %p130
        $region22: #{tpu_custom_call.1} parent=11 // pred_check_branch
          %189 = sbr.rel (%p187) target = $region24
        $region23: #{tpu_custom_call.1} parent=11 // pred_region
          _
        $region24: #{tpu_custom_call.1} parent=11 // pred_fallthru
          _
      $region12: #{tpu_custom_call.1} parent=5 // pred_fallthru
        _
      %p190 = scmp.lt.s32.totalorder %s15, 2
      // Predicated region
      $region25: #{tpu_custom_call.1} parent=5 // pred_check
        %p191 = pneg %p190
      $region26: #{tpu_custom_call.1} parent=5 // pred_check_branch
        %193 = sbr.rel (%p191) target = $region28
      $region27: #{tpu_custom_call.1} parent=5 // pred_region
        // Predicated region
        $region29: #{tpu_custom_call.1} parent=27 // pred_check
          %p194 = pneg %p35
        $region30: #{tpu_custom_call.1} parent=27 // pred_check_branch
          %196 = sbr.rel (%p194) target = $region32
        $region31: #{tpu_custom_call.1} parent=27 // pred_region
          %p197 = scmp.lt.s32.totalorder %s15, 1
          %s198 = scalar_select %p197, %s15, 1
          %s199 = smul.addr %s198, 8
          %s200 = scalar_lea.vmem %s0, %s199
        $region32: #{tpu_custom_call.1} parent=27 // pred_fallthru
          _
        // Predicated region
        $region33: #{tpu_custom_call.1} parent=27 // pred_check
          %p201 = pneg %p61
        $region34: #{tpu_custom_call.1} parent=27 // pred_check_branch
          %203 = sbr.rel (%p201) target = $region36
        $region35: #{tpu_custom_call.1} parent=27 // pred_region
          %p204 = scmp.lt.s32.totalorder %s15, 1
          %s205 = scalar_select %p204, %s15, 1
          %s206 = smul.addr %s205, 8
          %s207 = scalar_lea.vmem %s1, %s206
        $region36: #{tpu_custom_call.1} parent=27 // pred_fallthru
          _
      $region28: #{tpu_custom_call.1} parent=5 // pred_fallthru
        _
      %p208 = scmp.le.s32.totalorder 1, %s15
      %p209 = scmp.lt.s32.totalorder %s15, 3
      %p210 = pnand %p208, %p209
      %p211 = pneg %p210
      // Predicated region
      $region37: #{tpu_custom_call.1} parent=5 // pred_check
        _
      $region38: #{tpu_custom_call.1} parent=5 // pred_check_branch
        %213 = sbr.rel (%p210) target = $region40
      $region39: #{tpu_custom_call.1} parent=5 // pred_region
        %s214 = ssub.s32 %s15, 1
        // Predicated region
        $region41: #{tpu_custom_call.1} parent=39 // pred_check
          %p215 = pneg %p88
        $region42: #{tpu_custom_call.1} parent=39 // pred_check_branch
          %217 = sbr.rel (%p215) target = $region44
        $region43: #{tpu_custom_call.1} parent=39 // pred_region
          %218 = dma.done [#allocation3], 512
        $region44: #{tpu_custom_call.1} parent=39 // pred_fallthru
          _
        %p219 = scmp.lt.s32.totalorder %s20, 1
        %s220 = scalar_select %p219, %s20, 1
        %s221 = smul.addr %s220, 8
        %s222 = scalar_lea.vmem %s0, %s221
        %p223 = pneg %p41
        %p224 = pneg %p38
        %p225 = scmp.lt.s32.totalorder %s20, 1
        %s226 = scalar_select %p225, %s20, 1
        %s227 = smul.addr %s226, 8
        %s228 = scalar_lea.vmem %s1, %s227
        %p229 = pneg %p67
        %p230 = pneg %p64
        %p231 = pneg %p88
        %p232 = pneg %p85
        %p233 = pneg %p109
        %p234 = pneg %p106
        %p235 = pneg %p130
        %p236 = pneg %p127
        %p237 = pneg %p156
        %p238 = pneg %p153
        %s239 = sand.u32 %s143, 1
        %s240 = scalar_lea.sflag [#allocation4], %s239
        %s241 = sand.u32 %s143, 1
        %s242 = smul.addr %s241, 8
        %s243 = scalar_lea.vmem [#allocation5], %s242
        %p244 = scmp.lt.s32.totalorder %s20, 1
        %s245 = scalar_select %p244, %s20, 1
        %s246 = smul.addr %s245, 8
        %s247 = scalar_lea.vmem %s0, %s246
        %p248 = scmp.lt.s32.totalorder %s20, 1
        %s249 = scalar_select %p248, %s20, 1
        %s250 = smul.addr %s249, 8
        %s251 = scalar_lea.vmem %s1, %s250
        %v252 = vld [vmem:[%s247] sm:$0xff]
        %v253 = vld [vmem:[%s251] sm:$0xff]
        %v254 = vcvt.s32.f32 %v253
        %256 = vset.pattern.permute.xlu0 0
        %257 = vperm.xlu0 %256, %v254
        %v258 = vpop.permute.xlu0 %257
        %v260 = vmul.f32 %v252, %v258
        %v261 = vld [vmem:[#allocation2] sm:$0xff]
        %v262 = vld [vmem:[#allocation2 + $0x8] sm:$0xff]
        %v263 = vld [vmem:[#allocation2 + $0x10] sm:$0xff]
        %v264 = vld [vmem:[#allocation2 + $0x18] sm:$0xff]
        %v265 = vld [vmem:[%s3] sm:$0x1]
        %v267 = vlaneseq
        %v268 = vshrl.u32 %v267, 7
        %v269 = vsub.s32 0, %v268
        %v270 = vrot.slane %v265, %v269
        %vm272 = vcmask 261120
        %v274 = vsel %vm272, %v260, 0
        %276 = vmatprep.subr.mxu0 0.0
        %277 = vmatpush1.msra.mxu0 %v261
        %278 = vmatprep.subr.mxu0 0.0
        %279 = vmatpush1.msra.mxu0 %v262
        %280 = vmatprep.subr.mxu0 0.0
        %281 = vmatpush1.msra.mxu0 %v263
        %282 = vmatprep.subr.mxu0 0.0
        %283 = vmatpush1.msra.mxu0 %v264
        %284 = vmatprep.subr.mxu0 0.0
        %285 = vmatpush1.msra.mxu0 0.0
        %286 = vmatprep.subr.mxu0 0.0
        %287 = vmatpush1.msra.mxu0 0.0
        %288 = vmatprep.subr.mxu0 0.0
        %289 = vmatpush1.msra.mxu0 0.0
        %290 = vmatprep.subr.mxu0 0.0
        %291 = vmatpush1.msra.mxu0 0.0
        %292 = vmatprep.subr.mxu0 0.0
        %293 = vmatpush1.msra.mxu0 0.0
        %294 = vmatprep.subr.mxu0 0.0
        %295 = vmatpush1.msra.mxu0 0.0
        %296 = vmatprep.subr.mxu0 0.0
        %297 = vmatpush1.msra.mxu0 0.0
        %298 = vmatprep.subr.mxu0 0.0
        %299 = vmatpush1.msra.mxu0 0.0
        %300 = vmatprep.subr.mxu0 0.0
        %301 = vmatpush1.msra.mxu0 0.0
        %302 = vmatprep.subr.mxu0 0.0
        %303 = vmatpush1.msra.mxu0 0.0
        %304 = vmatprep.subr.mxu0 0.0
        %305 = vmatpush1.msra.mxu0 0.0
        %306 = vmatprep.subr.mxu0 0.0
        %307 = vmatpush1.msra.mxu0 0.0
        %308 = vmatprep.subr.mxu0 0.0
        %309 = vmatpush1.msra.mxu0 0.0
        %310 = vmatprep.subr.mxu0 0.0
        %311 = vmatpush1.msra.mxu0 0.0
        %312 = vmatprep.subr.mxu0 0.0
        %313 = vmatpush1.msra.mxu0 0.0
        %314 = vmatprep.subr.mxu0 0.0
        %315 = vmatpush1.msra.mxu0 0.0
        %316 = vmatprep.subr.mxu0 0.0
        %317 = vmatpush1.msra.mxu0 0.0
        %318 = vmatprep.subr.mxu0 0.0
        %319 = vmatpush1.msra.mxu0 0.0
        %320 = vmatprep.subr.mxu0 0.0
        %321 = vmatpush1.msra.mxu0 0.0
        %322 = vmatprep.subr.mxu0 0.0
        %323 = vmatpush1.msra.mxu0 0.0
        %324 = vmatprep.subr.mxu0 0.0
        %325 = vmatpush1.msra.mxu0 0.0
        %326 = vmatprep.subr.mxu0 0.0
        %327 = vmatpush1.msra.mxu0 0.0
        %328 = vmatprep.subr.mxu0 0.0
        %329 = vmatpush1.msra.mxu0 0.0
        %330 = vmatprep.subr.mxu0 0.0
        %331 = vmatpush1.msra.mxu0 0.0
        %332 = vmatprep.subr.mxu0 0.0
        %333 = vmatpush1.msra.mxu0 0.0
        %334 = vmatprep.subr.mxu0 0.0
        %335 = vmatpush1.msra.mxu0 0.0
        %336 = vmatprep.subr.mxu0 0.0
        %337 = vmatpush1.msra.mxu0 0.0
        %338 = vmatprep.subr.mxu0 0.0
        %339 = vmatpush1.msra.mxu0 0.0
        %340 = vmatprep.mubr.f32.mxu0 0.0
        %341 = vmatmul.mubr.f32.gmra.mrb[0].mxu0 %v274
        %v342 = vpop.f32.mrb[0].mxu0
        %v343 = vadd.f32 %v270, %v342
        %v344 = vpop.f32.mrb[0].mxu0
        %345 = vdwg.mxu0
        %v346 = vtanh.pop %v343
        %v347 = vld [vmem:[%s4] sm:$0x1]
        %v349 = vlaneseq
        %v350 = vshrl.u32 %v349, 7
        %v351 = vsub.s32 0, %v350
        %v352 = vrot.slane %v347, %v351
        %v354 = vmul.f32 %v346, %v352
        %355 = vadd.xlane.f32.xlu0 %v354
        %v356 = vpop.xlane.xlu0 %355
        %v357 = vxor.u32 %v356, 2147483648
        %v358 = vmul.f32 %v357, 1.442695
        %v359 = vpow.pop %v358
        %v360 = vadd.f32 %v359, 1.0
        %v361 = vrcp.pop %v360
        %v362 = vmul.f32 1.0, %v361
        %v363 = vmul.f32 %v252, %v362
        %364 = vst.msk [vmem:[%s243] sm:$0xff] %vm272, %v363
        %s365 = sand.u32 %s143, 1
        %s366 = scalar_lea.sflag [#allocation4], %s365
        %s367 = sand.u32 %s143, 1
        %s368 = smul.addr %s367, 8
        %s369 = scalar_lea.vmem [#allocation5], %s368
        // Predicated region
        $region45: #{tpu_custom_call.1} parent=39 // pred_check
          %p370 = pneg %p153
        $region46: #{tpu_custom_call.1} parent=39 // pred_check_branch
          %372 = sbr.rel (%p370) target = $region48
        $region47: #{tpu_custom_call.1} parent=39 // pred_region
          %s374 = ssub.s32 128, 128
          %375 = vsyncadd %s366, %s374
          %s376 = smul.addr %s20, 128
          %s377 = scalar_lea.hbm %s5, %s376
          %s379 = sshll.u32 %s369, 4
          %s380 = int_to_ptr.vmem [resolvable:$true] %s379
          %382 = dma.vmem_to_hbm [thread:$0]  %s380, 128, %s377, %s366
        $region48: #{tpu_custom_call.1} parent=39 // pred_fallthru
          _
      $region40: #{tpu_custom_call.1} parent=5 // pred_fallthru
        _
      %p383 = scmp.le.s32.totalorder 2, %s15
      // Predicated region
      $region49: #{tpu_custom_call.1} parent=5 // pred_check
        %p384 = pneg %p383
      $region50: #{tpu_custom_call.1} parent=5 // pred_check_branch
        %386 = sbr.rel (%p384) target = $region52
      $region51: #{tpu_custom_call.1} parent=5 // pred_region
        %s387 = ssub.s32 %s15, 2
        // Predicated region
        $region53: #{tpu_custom_call.1} parent=51 // pred_check
          %p388 = pneg %p159
        $region54: #{tpu_custom_call.1} parent=51 // pred_check_branch
          %390 = sbr.rel (%p388) target = $region56
        $region55: #{tpu_custom_call.1} parent=51 // pred_region
          %s391 = sand.u32 %s144, 1
          %s392 = scalar_lea.sflag [#allocation4], %s391
          %s393 = sand.u32 %s144, 1
          %s394 = smul.addr %s393, 8
          %s395 = scalar_lea.vmem [#allocation5], %s394
          %396 = dma.done %s392, 128
        $region56: #{tpu_custom_call.1} parent=51 // pred_fallthru
          _
      $region52: #{tpu_custom_call.1} parent=5 // pred_fallthru
        _
    $region6: #{tpu_custom_call.1} parent=1 // loop_footer
      %s19 = sadd.s32 1, %s15
    $region7: #{tpu_custom_call.1} parent=1 // loop_footer_branch
      %14 = sbr.rel target = $region3
    $region8: #{tpu_custom_call.1} parent=1 // loop_exit
      _
    %397 = vsyncpa [#allocation3], 1
    %s398 = scalar_lea.sflag [#allocation3], 1
    %399 = vsyncpa %s398, 1
    %400 = vsyncpa [#allocation4], 1
    %s401 = scalar_lea.sflag [#allocation4], 1
    %402 = vsyncpa %s401, 1

</llo_original>
